<compile_context>
chip_gen: v6e
topology: v6e:2x2x1
jax: 0.10.0
libtpu: 0.0.40
codegen_flags: <defaults>
</compile_context>

<pallas_src>
import functools

import jax
import jax.numpy as jnp
from jax.experimental import pallas as pl
from jax.experimental.pallas import tpu as pltpu


def _round_up(x, m):
    return ((x + m - 1) // m) * m


def _vmem_limit_and_tile_target():
    """Generation-aware (scoped-VMEM limit, input-tile byte target)."""
    try:
        phys = int(pltpu.get_tpu_info().vmem_capacity_bytes)
    except Exception:
        phys = 64 << 20  # conservative fallback: assume v7x-sized VMEM
    if phys >= (128 << 20):       # v5e / v6e (128 MiB physical VMEM)
        return 64 << 20, 8 << 20
    return 32 << 20, 4 << 20      # v7x (64 MiB physical VMEM)


def _maxpool_lane_kernel(x_ref, o_ref, *, factor, feat):
    """Lane-contiguous path: x_ref = (rows, factor*feat), o_ref = (rows, feat).

    Window element k of every output row lives at lanes [k*feat, (k+1)*feat);
    with feat % 128 == 0 these are plain aligned vector loads.  Requires
    T % factor == 0 (no partial window), so the only padded rows belong to
    out-of-bounds output rows which Pallas drops on writeback -> no masking.
    """
    acc = x_ref[:, 0:feat]
    for k in range(1, factor):
        acc = jnp.maximum(acc, x_ref[:, k * feat:(k + 1) * feat])
    o_ref[...] = acc


def _maxpool_time_full_kernel(x_ref, o_ref, *, factor, t_total):
    """Single-block path: x_ref = (T, F), o_ref = (Tout, F), everything static.

    Window j = max over input rows [j*factor, min((j+1)*factor, T)).  All reads
    stay strictly in bounds; the (possibly partial) last window is reduced by a
    separate short maximum tree.
    """
    tout = o_ref.shape[0]
    r = t_total - (tout - 1) * factor           # valid rows in last window
    n_main = tout if r == factor else tout - 1  # windows handled by strided reads

    if n_main > 0:
        acc = None
        for k in range(factor):
            sl = x_ref[pl.ds(k, n_main, stride=factor), :]
            acc = sl if acc is None else jnp.maximum(acc, sl)
        o_ref[pl.ds(0, n_main), :] = acc

    if r < factor:
        base = (tout - 1) * factor
        last = None
        for k in range(r):
            row = x_ref[pl.ds(base + k, 1), :]
            last = row if last is None else jnp.maximum(last, row)
        o_ref[pl.ds(tout - 1, 1), :] = last


def _maxpool_time_tiled_kernel(x_ref, o_ref, *, factor, t_total, tout_tile, fill):
    """Tiled path: x_ref = (tout_tile*factor, F), o_ref = (tout_tile, F).

    The last time tile's input block extends past T; the pipeline DMA only
    fills the valid rows, so rows whose global index >= t_total are garbage
    and are masked to `fill` before the reduction.  Out-of-bounds output rows
    are dropped on writeback.
    """
    tin_tile = tout_tile * factor
    tile_start = pl.program_id(1) * tin_tile    # first global input row of tile

    def window_max(masked):
        if masked:
            # Global input row of (output-row j, window element 0), (tout_tile, 1):
            # jnp.where broadcasts it over lanes, keeping the mask footprint tiny.
            row = jax.lax.broadcasted_iota(jnp.int32, (tout_tile, 1), 0)
            base = tile_start + factor * row
        acc = None
        for k in range(factor):
            sl = x_ref[pl.ds(k, tout_tile, stride=factor), :]  # element k of windows
            if masked:
                sl = jnp.where(base + k < t_total, sl, fill)
            acc = sl if acc is None else jnp.maximum(acc, sl)
        return acc

    @pl.when(tile_start + tin_tile <= t_total)   # fully in-bounds tile
    def _():
        o_ref[...] = window_max(False)

    @pl.when(tile_start + tin_tile > t_total)    # tail tile: mask garbage rows
    def _():
        o_ref[...] = window_max(True)


def maxpool_subsample(xs, xlens, factor, batch_first=True, *, tout_tile=None):
    """Pallas equivalent of MaxPoolSubsampler.forward.

    Args:
      xs:    f32/bf16 [B, T, F] (batch_first=True) or [T, B, F]
      xlens: i32 [B]
      factor: int subsampling factor
    Returns:
      (pooled xs with T' = ceil(T/factor), updated xlens)
    """
    if factor == 1:
        return xs, xlens
    if not batch_first:
        xs = jnp.swapaxes(xs, 0, 1)   # [T,B,F] -> [B,T,F]

    B, T, F = xs.shape
    tout = -(-T // factor)            # ceil_mode=True -> ceil(T/factor)
    itemsize = jnp.dtype(xs.dtype).itemsize
    if jnp.issubdtype(xs.dtype, jnp.floating):
        fill = float("-inf")
    else:
        fill = int(jnp.iinfo(xs.dtype).min)

    vmem_limit, target_in_bytes = _vmem_limit_and_tile_target()

    # Sublane granule: 8 rows for 4-byte dtypes, 16 for bf16, 32 for int8.
    sublane = {4: 8, 2: 16, 1: 32}.get(itemsize, 8)
    if tout_tile is None:
        tout_tile = max(1, target_in_bytes // (factor * F * itemsize))
    tout_tile = _round_up(min(tout_tile, tout), sublane)
    # v7x has two TensorCores; when B < 2 the batch axis alone cannot feed
    # both, so cap the time tile to guarantee at least two "parallel" tiles.
    if B < 2 and tout > sublane:
        tout_tile = min(tout_tile, _round_up(-(-tout // 2), sublane))

    cost = pl.CostEstimate(
        flops=B * tout * F * max(factor - 1, 1),
        transcendentals=0,
        bytes_accessed=(B * T * F + B * tout * F) * itemsize,
    )

    lane_path = (F % 128 == 0) and (T % factor == 0)

    if lane_path:
        # Free row-major reshape: window element k sits at lanes [k*F,(k+1)*F).
        xs_in = xs.reshape(B, tout, factor * F)
        tout_blk = tout if tout_tile >= tout else tout_tile
        kernel = functools.partial(_maxpool_lane_kernel, factor=factor, feat=F)
        grid = (B, pl.cdiv(tout, tout_blk))
        in_specs = [pl.BlockSpec((None, tout_blk, factor * F),
                                 lambda b, t: (b, t, 0))]
        out_specs = pl.BlockSpec((None, tout_blk, F), lambda b, t: (b, t, 0))
        dim_sem = ("parallel", "parallel")
    elif tout_tile >= tout:
        # Whole time axis fits in one block: full-dimension blocks, no OOB
        # traffic, partial last window handled with in-bounds reads.
        xs_in = xs
        kernel = functools.partial(_maxpool_time_full_kernel,
                                   factor=factor, t_total=T)
        grid = (B,)
        in_specs = [pl.BlockSpec((None, T, F), lambda b: (b, 0, 0))]
        out_specs = pl.BlockSpec((None, tout, F), lambda b: (b, 0, 0))
        dim_sem = ("parallel",)
    else:
        xs_in = xs
        tin_tile = tout_tile * factor
        kernel = functools.partial(_maxpool_time_tiled_kernel,
                                   factor=factor, t_total=T,
                                   tout_tile=tout_tile, fill=fill)
        grid = (B, pl.cdiv(tout, tout_tile))
        in_specs = [pl.BlockSpec((None, tin_tile, F), lambda b, t: (b, t, 0))]
        out_specs = pl.BlockSpec((None, tout_tile, F), lambda b, t: (b, t, 0))
        dim_sem = ("parallel", "parallel")

    out = pl.pallas_call(
        kernel,
        out_shape=jax.ShapeDtypeStruct((B, tout, F), xs.dtype),
        grid=grid,
        in_specs=in_specs,
        out_specs=out_specs,
        compiler_params=pltpu.CompilerParams(
            dimension_semantics=dim_sem,
            vmem_limit_bytes=vmem_limit,
        ),
        cost_estimate=cost,
    )(xs_in)

    if not batch_first:
        out = jnp.swapaxes(out, 0, 1)

    # update_lens_1d for MaxPool1d(kernel=stride=factor, pad=0, ceil_mode=True):
    # L' = ceil(L / factor).  Trivial scalar math, kept in plain JAX.
    xlens_out = ((xlens + factor - 1) // factor).astype(xlens.dtype)
    return out, xlens_out


def _reference(xs, xlens, factor):
    """Pure-JAX reference for validation."""
    if factor == 1:
        return xs, xlens
    B, T, F = xs.shape
    tout = -(-T // factor)
    tpad = tout * factor
    xs_pad = jnp.pad(xs, ((0, 0), (0, tpad - T), (0, 0)),
                     constant_values=-jnp.inf)
    out = jnp.max(xs_pad.reshape(B, tout, factor, F), axis=2)
    return out, (xlens + factor - 1) // factor


if __name__ == "__main__":
    key = jax.random.PRNGKey(0)
    k1, k2 = jax.random.split(key)

    def check(xs, xlens, factor, **kw):
        out, out_lens = maxpool_subsample(xs, xlens, factor, **kw)
        out = jax.block_until_ready(out)
        out_lens = jax.block_until_ready(out_lens)
        ref_out, ref_lens = _reference(xs, xlens, factor)
        assert out.shape == ref_out.shape, (out.shape, ref_out.shape)
        assert jnp.allclose(out, ref_out), f"output mismatch (factor={factor}, kw={kw})"
        assert jnp.array_equal(out_lens, ref_lens), f"length mismatch (factor={factor}, kw={kw})"

    # Strided paths (F=32 not a multiple of 128).
    B, T, F = 2, 40, 32
    xs = jax.random.normal(k1, (B, T, F), dtype=jnp.float32)
    xlens = jnp.array([T, 27], dtype=jnp.int32)
    check(xs, xlens, 3, tout_tile=8)   # tiled strided path with masked tail tile
    check(xs, xlens, 3)                # single block, partial last window (ceil_mode)
    check(xs, xlens, 4)                # single block, T divisible by factor

    # Lane-contiguous fast path (F % 128 == 0, T % factor == 0).
    B2, T2, F2 = 2, 48, 128
    xs2 = jax.random.normal(k2, (B2, T2, F2), dtype=jnp.float32)
    xlens2 = jnp.array([T2, 31], dtype=jnp.int32)
    check(xs2, xlens2, 4)                 # one time tile per batch row
    check(xs2, xlens2, 4, tout_tile=8)    # tiled lane path with partial edge tile

    # B == 1: time axis is force-split so both v7x TensorCores get work.
    check(xs2[:1], xlens2[:1], 4)

    # factor == 1 is a passthrough
    out1, len1 = maxpool_subsample(xs, xlens, 1)
    assert out1 is xs and len1 is xlens

    print("KERNEL_OK")
</pallas_src>

<mosaic_0001>
module attributes {stable_mosaic.version = 11 : i64} {
  func.func @_maxpool_time_tiled_kernel(%arg0: i32, %arg1: i32, %arg2: memref<1x24x32xf32, #tpu.memory_space<vmem>>, %arg3: memref<1x8x32xf32, #tpu.memory_space<vmem>>) attributes {dimension_semantics = [#tpu.dimension_semantics<parallel>, #tpu.dimension_semantics<parallel>], iteration_bounds = array<i64: 2, 2>, scalar_prefetch = 0 : i64, scratch_operands = 0 : i64, tpu.core_type = #tpu.core_type<tc>, window_params = [{transform_indices = @transform_0, window_bounds = array<i64: 1, 24, 32>}, {transform_indices = @transform_1, window_bounds = array<i64: 1, 8, 32>}]} {
    %c24_i32 = arith.constant 24 : i32
    %0 = arith.muli %arg1, %c24_i32 : i32
    %c24_i32_0 = arith.constant 24 : i32
    %1 = arith.addi %0, %c24_i32_0 : i32
    %c40_i32 = arith.constant 40 : i32
    %2 = arith.cmpi sle, %1, %c40_i32 : i32
    %3 = arith.extui %2 : i1 to i32
    %c0_i32 = arith.constant 0 : i32
    %4 = arith.cmpi ne, %3, %c0_i32 : i32
    scf.if %4 {
      %c0 = arith.constant 0 : index
      %c0_4 = arith.constant 0 : index
      %c0_5 = arith.constant 0 : index
      %9 = tpu.strided_load %arg2[%c0, %c0_4, %c0_5] {strides = array<i32: 1, 3, 1>} : memref<1x24x32xf32, #tpu.memory_space<vmem>>, vector<1x8x32xf32>
      %10 = vector.shape_cast %9 : vector<1x8x32xf32> to vector<8x32xf32>
      %c0_6 = arith.constant 0 : index
      %c1 = arith.constant 1 : index
      %c0_7 = arith.constant 0 : index
      %11 = tpu.strided_load %arg2[%c0_6, %c1, %c0_7] {strides = array<i32: 1, 3, 1>} : memref<1x24x32xf32, #tpu.memory_space<vmem>>, vector<1x8x32xf32>
      %12 = vector.shape_cast %11 : vector<1x8x32xf32> to vector<8x32xf32>
      %13 = arith.maximumf %10, %12 : vector<8x32xf32>
      %c0_8 = arith.constant 0 : index
      %c2 = arith.constant 2 : index
      %c0_9 = arith.constant 0 : index
      %14 = tpu.strided_load %arg2[%c0_8, %c2, %c0_9] {strides = array<i32: 1, 3, 1>} : memref<1x24x32xf32, #tpu.memory_space<vmem>>, vector<1x8x32xf32>
      %15 = vector.shape_cast %14 : vector<1x8x32xf32> to vector<8x32xf32>
      %16 = arith.maximumf %13, %15 : vector<8x32xf32>
      %c0_10 = arith.constant 0 : index
      %c0_11 = arith.constant 0 : index
      %c0_12 = arith.constant 0 : index
      %17 = vector.load %arg3[%c0_10, %c0_11, %c0_12] : memref<1x8x32xf32, #tpu.memory_space<vmem>>, vector<1x8x32xf32>
      %18 = vector.shape_cast %17 : vector<1x8x32xf32> to vector<8x32xf32>
      %19 = vector.shape_cast %16 : vector<8x32xf32> to vector<1x8x32xf32>
      tpu.vector_store %arg3[%c0_10, %c0_11, %c0_12], %19 {strides = array<i32>} : memref<1x8x32xf32, #tpu.memory_space<vmem>>, vector<1x8x32xf32>,
    } else {
    }
    %c24_i32_1 = arith.constant 24 : i32
    %5 = arith.addi %0, %c24_i32_1 : i32
    %c40_i32_2 = arith.constant 40 : i32
    %6 = arith.cmpi sgt, %5, %c40_i32_2 : i32
    %7 = arith.extui %6 : i1 to i32
    %c0_i32_3 = arith.constant 0 : i32
    %8 = arith.cmpi ne, %7, %c0_i32_3 : i32
    scf.if %8 {
      %9 = tpu.iota {dimensions = array<i32: 0>} : vector<8x1xi32>
      %c3_i32 = arith.constant 3 : i32
      %10 = vector.broadcast %c3_i32 : i32 to vector<8x1xi32>
      %11 = arith.muli %10, %9 : vector<8x1xi32>
      %12 = vector.broadcast %0 : i32 to vector<8x1xi32>
      %13 = arith.addi %12, %11 : vector<8x1xi32>
      %c0 = arith.constant 0 : index
      %c0_4 = arith.constant 0 : index
      %c0_5 = arith.constant 0 : index
      %14 = tpu.strided_load %arg2[%c0, %c0_4, %c0_5] {strides = array<i32: 1, 3, 1>} : memref<1x24x32xf32, #tpu.memory_space<vmem>>, vector<1x8x32xf32>
      %15 = vector.shape_cast %14 : vector<1x8x32xf32> to vector<8x32xf32>
      %c0_i32_6 = arith.constant 0 : i32
      %16 = vector.broadcast %c0_i32_6 : i32 to vector<8x1xi32>
      %17 = arith.addi %13, %16 : vector<8x1xi32>
      %c40_i32_7 = arith.constant 40 : i32
      %18 = vector.broadcast %c40_i32_7 : i32 to vector<8x1xi32>
      %19 = arith.cmpi slt, %17, %18 : vector<8x1xi32>
      %cst = arith.constant 0xFF800000 : f32
      %20 = vector.shape_cast %19 : vector<8x1xi1> to vector<8x1xi1>
      %21 = vector.broadcast %20 : vector<8x1xi1> to vector<8x32xi1>
      %22 = vector.broadcast %cst : f32 to vector<8x32xf32>
      %23 = arith.select %21, %15, %22 : vector<8x32xi1>, vector<8x32xf32>
      %c0_8 = arith.constant 0 : index
      %c1 = arith.constant 1 : index
      %c0_9 = arith.constant 0 : index
      %24 = tpu.strided_load %arg2[%c0_8, %c1, %c0_9] {strides = array<i32: 1, 3, 1>} : memref<1x24x32xf32, #tpu.memory_space<vmem>>, vector<1x8x32xf32>
      %25 = vector.shape_cast %24 : vector<1x8x32xf32> to vector<8x32xf32>
      %c1_i32 = arith.constant 1 : i32
      %26 = vector.broadcast %c1_i32 : i32 to vector<8x1xi32>
      %27 = arith.addi %13, %26 : vector<8x1xi32>
      %c40_i32_10 = arith.constant 40 : i32
      %28 = vector.broadcast %c40_i32_10 : i32 to vector<8x1xi32>
      %29 = arith.cmpi slt, %27, %28 : vector<8x1xi32>
      %cst_11 = arith.constant 0xFF800000 : f32
      %30 = vector.shape_cast %29 : vector<8x1xi1> to vector<8x1xi1>
      %31 = vector.broadcast %30 : vector<8x1xi1> to vector<8x32xi1>
      %32 = vector.broadcast %cst_11 : f32 to vector<8x32xf32>
      %33 = arith.select %31, %25, %32 : vector<8x32xi1>, vector<8x32xf32>
      %34 = arith.maximumf %23, %33 : vector<8x32xf32>
      %c0_12 = arith.constant 0 : index
      %c2 = arith.constant 2 : index
      %c0_13 = arith.constant 0 : index
      %35 = tpu.strided_load %arg2[%c0_12, %c2, %c0_13] {strides = array<i32: 1, 3, 1>} : memref<1x24x32xf32, #tpu.memory_space<vmem>>, vector<1x8x32xf32>
      %36 = vector.shape_cast %35 : vector<1x8x32xf32> to vector<8x32xf32>
      %c2_i32 = arith.constant 2 : i32
      %37 = vector.broadcast %c2_i32 : i32 to vector<8x1xi32>
      %38 = arith.addi %13, %37 : vector<8x1xi32>
      %c40_i32_14 = arith.constant 40 : i32
      %39 = vector.broadcast %c40_i32_14 : i32 to vector<8x1xi32>
      %40 = arith.cmpi slt, %38, %39 : vector<8x1xi32>
      %cst_15 = arith.constant 0xFF800000 : f32
      %41 = vector.shape_cast %40 : vector<8x1xi1> to vector<8x1xi1>
      %42 = vector.broadcast %41 : vector<8x1xi1> to vector<8x32xi1>
      %43 = vector.broadcast %cst_15 : f32 to vector<8x32xf32>
      %44 = arith.select %42, %36, %43 : vector<8x32xi1>, vector<8x32xf32>
      %45 = arith.maximumf %34, %44 : vector<8x32xf32>
      %c0_16 = arith.constant 0 : index
      %c0_17 = arith.constant 0 : index
      %c0_18 = arith.constant 0 : index
      %46 = vector.load %arg3[%c0_16, %c0_17, %c0_18] : memref<1x8x32xf32, #tpu.memory_space<vmem>>, vector<1x8x32xf32>
      %47 = vector.shape_cast %46 : vector<1x8x32xf32> to vector<8x32xf32>
      %48 = vector.shape_cast %45 : vector<8x32xf32> to vector<1x8x32xf32>
      tpu.vector_store %arg3[%c0_16, %c0_17, %c0_18], %48 {strides = array<i32>} : memref<1x8x32xf32, #tpu.memory_space<vmem>>, vector<1x8x32xf32>,
    } else {
    }
    return
  }
  func.func @transform_0(%arg0: i32, %arg1: i32) -> (i32, i32, i32) {
    %c0_i32 = arith.constant 0 : i32
    %c0_i32_0 = arith.constant 0 : i32
    return %arg0, %arg1, %c0_i32 : i32, i32, i32
  }
  func.func @transform_1(%arg0: i32, %arg1: i32) -> (i32, i32, i32) {
    %c0_i32 = arith.constant 0 : i32
    %c0_i32_0 = arith.constant 0 : i32
    return %arg0, %arg1, %c0_i32 : i32, i32, i32
  }
}

</mosaic_0001>

<llo_original>
// kernel: tpu_custom_call.1
$region0: #{tpu_custom_call.1}
  #allocation0 [shape = 'u32[]', space=smem, size = 0x4, offset = 0x4, fixed_abs, tag = 'smem constant byte address 0x4 - core index']
  #allocation1 [shape = 'u32[144,128]{1,0:T(1,128)}', space=vmem, size = 0x12000, scoped, tag = 'internal scratch']
  %s0 = inlined_call_operand.vmem [shape: f32[2,40,32], index: 0, kind: input, shape index: {}]
  %s1 = inlined_call_operand.vmem [shape: f32[2,14,32], index: 1, kind: output, shape index: {}]
  %s2 = sld [smem:[#allocation0]]
  $region45: #{tpu_custom_call.1} parent=0
    _
  %s4 = ssub.s32 1, %s2
  %s5 = scalar_select 0, %s4, %s2
  loop: start=0, step=1, limit=6
  $region2: #{tpu_custom_call.1} parent=0 // loop_pre_header
    _
  $region3: #{tpu_custom_call.1} parent=0 // loop_header
    %s7 = sphi 0, %s11
    %p8 = scmp.ge.s32.totalorder %s7, 6
    %s14 = sphi 0, %s26
    %s15 = sphi 0, %s22
    %s16 = sphi 0, %s14
    %s17 = sphi 0, %s15
    %s18 = sphi 0, %s16
    %s19 = sphi 0, %s17
    %s31 = sphi 0, %s33
    %s34 = sphi 0, %s31
    %s35 = sphi 0, %s34
    %s51 = sphi 0, %s35
    %s59 = sphi 0, %s61
    %s62 = sphi 0, %s59
    %s63 = sphi 0, %s62
    %s79 = sphi 0, %s63
  $region4: #{tpu_custom_call.1} parent=0 // loop_header_branch
    %10 = sbr.rel (%p8) target = $region8
  $region5: #{tpu_custom_call.1} parent=0 // loop_body
    %s12 = ssub.s32 %s7, 1
    %s13 = ssub.s32 %s7, 2
    %s20 = sadd.s32 1, %s15
    %p21 = scmp.ge.s32.totalorder %s20, 2
    %s22 = scalar_select %p21, 0, %s20
    %s23 = sadd.s32 1, %s14
    %s24 = scalar_select %p21, %s23, %s14
    %p25 = scmp.ge.s32.totalorder %s24, 2
    %s26 = scalar_select %p25, 0, %s24
    %s27 = ssub.s32 %s14, %s26
    %s28 = ssub.s32 %s15, %s22
    %s29 = sor.u32 %s27, %s28
    %p30 = scmp.eq.s32.totalorder %s29, 0
    %s32 = sadd.s32 %s31, 1
    %s33 = scalar_select %p30, %s31, %s32
    %p36 = pneg %p30
    %p37 = scmp.eq.s32.totalorder %s7, 3
    %p38 = por %p36, %p37
    %p39 = scmp.ne.s32.totalorder %s31, %s34
    %p40 = scmp.eq.s32.totalorder %s7, 0
    %p41 = por %p39, %p40
    %p42 = scmp.ne.s32.totalorder %s31, %s34
    %p43 = scmp.eq.s32.totalorder %s12, 3
    %p44 = por %p42, %p43
    %p45 = scmp.ne.s32.totalorder %s34, %s35
    %p46 = scmp.eq.s32.totalorder %s12, 0
    %p47 = por %p45, %p46
    %p48 = scmp.ne.s32.totalorder %s34, %s35
    %p49 = scmp.eq.s32.totalorder %s13, 3
    %p50 = por %p48, %p49
    %p52 = scmp.ne.s32.totalorder %s35, %s51
    %p53 = scmp.eq.s32.totalorder %s13, 0
    %p54 = por %p52, %p53
    %s55 = ssub.s32 %s14, %s26
    %s56 = ssub.s32 %s15, %s22
    %s57 = sor.u32 %s55, %s56
    %p58 = scmp.eq.s32.totalorder %s57, 0
    %s60 = sadd.s32 %s59, 1
    %s61 = scalar_select %p58, %s59, %s60
    %p64 = pneg %p58
    %p65 = scmp.eq.s32.totalorder %s7, 3
    %p66 = por %p64, %p65
    %p67 = scmp.ne.s32.totalorder %s59, %s62
    %p68 = scmp.eq.s32.totalorder %s7, 0
    %p69 = por %p67, %p68
    %p70 = scmp.ne.s32.totalorder %s59, %s62
    %p71 = scmp.eq.s32.totalorder %s12, 3
    %p72 = por %p70, %p71
    %p73 = scmp.ne.s32.totalorder %s62, %s63
    %p74 = scmp.eq.s32.totalorder %s12, 0
    %p75 = por %p73, %p74
    %p76 = scmp.ne.s32.totalorder %s62, %s63
    %p77 = scmp.eq.s32.totalorder %s13, 3
    %p78 = por %p76, %p77
    %p80 = scmp.ne.s32.totalorder %s63, %s79
    %p81 = scmp.eq.s32.totalorder %s13, 0
    %p82 = por %p80, %p81
    %p83 = scmp.le.s32.totalorder 1, %s7
    %p84 = scmp.lt.s32.totalorder %s7, 5
    %p85 = pnand %p83, %p84
    %p86 = pneg %p85
    // Predicated region
    $region9: #{tpu_custom_call.1} parent=5 // pred_check
      _
    $region10: #{tpu_custom_call.1} parent=5 // pred_check_branch
      %88 = sbr.rel (%p85) target = $region12
    $region11: #{tpu_custom_call.1} parent=5 // pred_region
      %s89 = ssub.s32 %s7, 1
    $region12: #{tpu_custom_call.1} parent=5 // pred_fallthru
      _
    %p90 = scmp.lt.s32.totalorder %s7, 4
    // Predicated region
    $region13: #{tpu_custom_call.1} parent=5 // pred_check
      %p91 = pneg %p90
    $region14: #{tpu_custom_call.1} parent=5 // pred_check_branch
      %93 = sbr.rel (%p91) target = $region16
    $region15: #{tpu_custom_call.1} parent=5 // pred_region
      // Predicated region
      $region17: #{tpu_custom_call.1} parent=15 // pred_check
        %p94 = pneg %p41
      $region18: #{tpu_custom_call.1} parent=15 // pred_check_branch
        %96 = sbr.rel (%p94) target = $region20
      $region19: #{tpu_custom_call.1} parent=15 // pred_region
        %s97 = smul.u32 3, %s15
        %s98 = ssub.s32 5, %s97
        %p99 = scmp.lt.s32.totalorder %s98, 3
        %s100 = scalar_select %p99, %s98, 3
        %s101 = smul.u32 128, %s100
        %p102 = scmp.lt.s32.totalorder %s14, 1
        %s103 = scalar_select %p102, %s14, 1
        %p104 = scmp.lt.s32.totalorder %s97, 4
        %s105 = scalar_select %p104, %s97, 4
        %s106 = smul.addr %s103, 5
        %s107 = sadd.s32 %s105, %s106
        %s108 = smul.addr %s107, 8
        %s109 = scalar_lea.vmem %s0, %s108
        %s110 = smul.u32 3, %s15
        %s111 = ssub.s32 5, %s110
        %p112 = scmp.lt.s32.totalorder %s111, 3
        %s113 = scalar_select %p112, %s111, 3
        %s114 = smul.u32 128, %s113
      $region20: #{tpu_custom_call.1} parent=15 // pred_fallthru
        _
    $region16: #{tpu_custom_call.1} parent=5 // pred_fallthru
      _
    %p115 = scmp.le.s32.totalorder 1, %s7
    %p116 = scmp.lt.s32.totalorder %s7, 5
    %p117 = pnand %p115, %p116
    %p118 = pneg %p117
    // Predicated region
    $region21: #{tpu_custom_call.1} parent=5 // pred_check
      _
    $region22: #{tpu_custom_call.1} parent=5 // pred_check_branch
      %120 = sbr.rel (%p117) target = $region24
    $region23: #{tpu_custom_call.1} parent=5 // pred_region
      %s121 = ssub.s32 %s7, 1
      %s122 = smul.u32 3, %s17
      %s123 = ssub.s32 5, %s122
      %p124 = scmp.lt.s32.totalorder %s123, 3
      %s125 = scalar_select %p124, %s123, 3
      %s126 = smul.u32 128, %s125
      %p127 = scmp.lt.s32.totalorder %s16, 1
      %s128 = scalar_select %p127, %s16, 1
      %p129 = scmp.lt.s32.totalorder %s122, 4
      %s130 = scalar_select %p129, %s122, 4
      %s131 = smul.addr %s128, 5
      %s132 = sadd.s32 %s130, %s131
      %s133 = smul.addr %s132, 8
      %s134 = scalar_lea.vmem %s0, %s133
      %p135 = pneg %p47
      %p136 = pneg %p44
      %p137 = pneg %p75
      %p138 = pneg %p72
      %p139 = scmp.lt.s32.totalorder %s16, 1
      %s140 = scalar_select %p139, %s16, 1
      %p141 = scmp.lt.s32.totalorder %s17, 1
      %s142 = scalar_select %p141, %s17, 1
      %s143 = smul.addr %s140, 2
      %s144 = sadd.s32 %s142, %s143
      %s145 = smul.addr %s144, 8
      %s146 = scalar_lea.vmem %s1, %s145
      %s147 = smul.u32 3, %s17
      %s148 = ssub.s32 5, %s147
      %p149 = scmp.lt.s32.totalorder %s148, 3
      %s150 = scalar_select %p149, %s148, 3
      %s151 = smul.u32 128, %s150
      %p152 = scmp.lt.s32.totalorder %s16, 1
      %s153 = scalar_select %p152, %s16, 1
      %p154 = scmp.lt.s32.totalorder %s147, 4
      %s155 = scalar_select %p154, %s147, 4
      %s156 = smul.addr %s153, 5
      %s157 = sadd.s32 %s155, %s156
      %s158 = smul.addr %s157, 8
      %s159 = scalar_lea.vmem %s0, %s158
      %s160 = smul.u32 3, %s17
      %s161 = ssub.s32 5, %s160
      %p162 = scmp.lt.s32.totalorder %s161, 3
      %s163 = scalar_select %p162, %s161, 3
      %s164 = smul.u32 128, %s163
      %p165 = scmp.lt.s32.totalorder %s16, 1
      %s166 = scalar_select %p165, %s16, 1
      %p167 = scmp.lt.s32.totalorder %s17, 1
      %s168 = scalar_select %p167, %s17, 1
      %s169 = smul.addr %s166, 2
      %s170 = sadd.s32 %s168, %s169
      %s171 = smul.addr %s170, 8
      %s172 = scalar_lea.vmem %s1, %s171
      %s173 = smul.u32 %s17, 24
      %s174 = sadd.s32 %s173, 24
      %p175 = scmp.le.s32.totalorder %s174, 40
      // Predicated region
      $region25: #{tpu_custom_call.1} parent=23 // pred_check
        %p176 = pneg %p175
      $region26: #{tpu_custom_call.1} parent=23 // pred_check_branch
        %178 = sbr.rel (%p176) target = $region28
      $region27: #{tpu_custom_call.1} parent=23 // pred_region
        %v179 = vld [vmem:[%s159] ss:$3 sm:$0xff]
        %s180 = scalar_lea.vmem %s159, 1
        %v181 = vld [vmem:[%s180] ss:$3 sm:$0xff]
        %v182 = vmax.f32 %v179, %v181
        %s183 = scalar_lea.vmem %s159, 2
        %v184 = vld [vmem:[%s183] ss:$3 sm:$0xff]
        %v185 = vmax.f32 %v182, %v184
        %vm186 = vcmask 261120
        %187 = vst.msk [vmem:[%s172] sm:$0xff] %vm186, %v185
      $region28: #{tpu_custom_call.1} parent=23 // pred_fallthru
        _
      %p188 = scmp.gt.s32.totalorder %s174, 40
      // Predicated region
      $region29: #{tpu_custom_call.1} parent=23 // pred_check
        %p189 = pneg %p188
      $region30: #{tpu_custom_call.1} parent=23 // pred_check_branch
        %191 = sbr.rel (%p189) target = $region32
      $region31: #{tpu_custom_call.1} parent=23 // pred_region
        %v192 = vlaneseq
        %v193 = vshrl.u32 %v192, 7
        %v194 = vmul.u32 %v193, 3
        %v195 = vstv %s173
        %v196 = vadd.s32 %v195, %v194
        %v197 = vld [vmem:[%s159] ss:$3 sm:$0xff]
        %vm198 = vcmp.lt.s32.totalorder %v196, 40
        %v199 = vsel %vm198, 1, 0
        %vm200 = vcmp.eq.s32.totalorder %v199, 1
        %v201 = vsel %vm200, %v197, -inf
        %s202 = scalar_lea.vmem %s159, 1
        %v203 = vld [vmem:[%s202] ss:$3 sm:$0xff]
        %v204 = vadd.s32 %v196, 1
        %vm205 = vcmp.lt.s32.totalorder %v204, 40
        %v206 = vsel %vm205, 1, 0
        %vm207 = vcmp.eq.s32.totalorder %v206, 1
        %v208 = vsel %vm207, %v203, -inf
        %v209 = vmax.f32 %v201, %v208
        %s210 = scalar_lea.vmem %s159, 2
        %v211 = vld [vmem:[%s210] ss:$3 sm:$0xff]
        %v212 = vadd.s32 %v196, 2
        %vm213 = vcmp.lt.s32.totalorder %v212, 40
        %v214 = vsel %vm213, 1, 0
        %vm215 = vcmp.eq.s32.totalorder %v214, 1
        %v216 = vsel %vm215, %v211, -inf
        %v217 = vmax.f32 %v209, %v216
        %vm218 = vcmask 261120
        %219 = vst.msk [vmem:[%s172] sm:$0xff] %vm218, %v217
      $region32: #{tpu_custom_call.1} parent=23 // pred_fallthru
        _
      %p220 = scmp.lt.s32.totalorder %s16, 1
      %s221 = scalar_select %p220, %s16, 1
      %p222 = scmp.lt.s32.totalorder %s17, 1
      %s223 = scalar_select %p222, %s17, 1
      %s224 = smul.addr %s221, 2
      %s225 = sadd.s32 %s223, %s224
      %s226 = smul.addr %s225, 8
      %s227 = scalar_lea.vmem %s1, %s226
      // Predicated region
      $region33: #{tpu_custom_call.1} parent=23 // pred_check
        %p228 = pneg %p72
      $region34: #{tpu_custom_call.1} parent=23 // pred_check_branch
        %230 = sbr.rel (%p228) target = $region36
      $region35: #{tpu_custom_call.1} parent=23 // pred_region
        _
      $region36: #{tpu_custom_call.1} parent=23 // pred_fallthru
        _
    $region24: #{tpu_custom_call.1} parent=5 // pred_fallthru
      _
    %p231 = scmp.le.s32.totalorder 2, %s7
    // Predicated region
    $region37: #{tpu_custom_call.1} parent=5 // pred_check
      %p232 = pneg %p231
    $region38: #{tpu_custom_call.1} parent=5 // pred_check_branch
      %234 = sbr.rel (%p232) target = $region40
    $region39: #{tpu_custom_call.1} parent=5 // pred_region
      %s235 = ssub.s32 %s7, 2
      // Predicated region
      $region41: #{tpu_custom_call.1} parent=39 // pred_check
        %p236 = pneg %p78
      $region42: #{tpu_custom_call.1} parent=39 // pred_check_branch
        %238 = sbr.rel (%p236) target = $region44
      $region43: #{tpu_custom_call.1} parent=39 // pred_region
        %p239 = scmp.lt.s32.totalorder %s18, 1
        %s240 = scalar_select %p239, %s18, 1
        %p241 = scmp.lt.s32.totalorder %s19, 1
        %s242 = scalar_select %p241, %s19, 1
        %s243 = smul.addr %s240, 2
        %s244 = sadd.s32 %s242, %s243
        %s245 = smul.addr %s244, 8
        %s246 = scalar_lea.vmem %s1, %s245
      $region44: #{tpu_custom_call.1} parent=39 // pred_fallthru
        _
    $region40: #{tpu_custom_call.1} parent=5 // pred_fallthru
      _
  $region6: #{tpu_custom_call.1} parent=0 // loop_footer
    %s11 = sadd.s32 1, %s7
  $region7: #{tpu_custom_call.1} parent=0 // loop_footer_branch
    %6 = sbr.rel target = $region3
  $region8: #{tpu_custom_call.1} parent=0 // loop_exit
    _

</llo_original>
